<compile_context>
chip_gen: v6e
topology: v6e:2x2x1
jax: 0.10.0
libtpu: 0.0.40
codegen_flags: <defaults>
</compile_context>

<pallas_src>
import jax
import jax.numpy as jnp
from jax import lax
from jax.experimental import pallas as pl
from jax.experimental.pallas import tpu as pltpu


def _decoder_kernel(w_ref, x_ref, b_ref, o_ref):
    # w_ref: (T, H)        weight^T, resident across the grid
    # x_ref: (rt, H)       row-tile of flattened hidden states (natural layout)
    # b_ref: (T, 1)        bias, broadcast over the lane axis
    # o_ref: (T, rt)       log_softmax(logits)^T, lane-dense output tile
    logits = lax.dot_general(
        w_ref[...], x_ref[...],
        dimension_numbers=(((1,), (1,)), ((), ())),   # contract over H (trans_b)
        preferred_element_type=jnp.float32,
    )                                                  # MXU: (T, rt)
    logits = logits + b_ref[...]                       # (T,1) bcast over lanes
    m = jnp.max(logits, axis=0, keepdims=True)         # sublane reduce (1, rt)
    shifted = logits - m
    lse = jnp.log(jnp.sum(jnp.exp(shifted), axis=0, keepdims=True))
    o_ref[...] = (shifted - lse).astype(o_ref.dtype)   # log_softmax over T


def trig_decoder_w(hidden_in, weight, bias, batch_sent_lens=None, *, row_tile=1024):
    """JAX/Pallas equivalent of TrigDecoderw.forward.

    hidden_in : (B, S, H)  float32
    weight    : (H, T)     float32  (transpose of torch's (T, H) Linear weight)
    bias      : (T,)       float32
    returns   : (B*S, T)   float32 log-probabilities
    """
    del batch_sent_lens  # unused by the torch module's forward as well
    B, S, H = hidden_in.shape
    T = weight.shape[1]
    rows = B * S

    # Natural (rows, H) layout -- no HBM transpose, no padded copy of X.
    x2d = hidden_in.reshape(rows, H)

    n_tiles = pl.cdiv(rows, row_tile)
    rows_padded = n_tiles * row_tile          # output allocation only

    wT = weight.T                             # (T, H)
    b2d = bias.reshape(T, 1)

    outT = pl.pallas_call(
        _decoder_kernel,
        out_shape=jax.ShapeDtypeStruct((T, rows_padded), jnp.float32),
        grid_spec=pltpu.PrefetchScalarGridSpec(
            num_scalar_prefetch=0,
            grid=(n_tiles,),
            in_specs=[
                pl.BlockSpec((T, H), lambda i: (0, 0)),          # weight^T (resident)
                pl.BlockSpec((row_tile, H), lambda i: (i, 0)),   # streamed X tiles
                pl.BlockSpec((T, 1), lambda i: (0, 0)),          # bias (resident)
            ],
            out_specs=pl.BlockSpec((T, row_tile), lambda i: (0, i)),
        ),
        compiler_params=pltpu.CompilerParams(
            dimension_semantics=("parallel",),   # splits across v7x's 2 TCs when n_tiles >= 2
            vmem_limit_bytes=48 * 1024 * 1024,   # under v7x's 64 MiB physical VMEM
        ),
    )(wT, x2d, b2d)

    # Layout plumbing back to the module's (B*S, T) output; padded tail
    # columns (possibly garbage-derived) are discarded here.
    return outT[:, :rows].T


def _reference(hidden_in, weight, bias):
    B, S, H = hidden_in.shape
    x2d = hidden_in.reshape(B * S, H)
    logits = x2d @ weight + bias[None, :]
    return jax.nn.log_softmax(logits, axis=1)


if __name__ == "__main__":
    # Config implied by the module: bilstm=True, lstm_hidden_dim=16 -> H=32,
    # tagset_size=8. Small shapes: batch=2, seq=8.
    B, S = 2, 8
    lstm_hidden_dim = 16
    H = 2 * lstm_hidden_dim      # hidden_dim_encoder (bilstm)
    T = 8                        # tagset_size

    key = jax.random.PRNGKey(0)
    k_x, k_w, k_b = jax.random.split(key, 3)
    hidden_in = jax.random.normal(k_x, (B, S, H), dtype=jnp.float32)
    # Deterministic Linear params (stored as (H, T) = torch weight transposed).
    weight = jax.random.normal(k_w, (H, T), dtype=jnp.float32) * 0.1
    bias = jax.random.normal(k_b, (T,), dtype=jnp.float32) * 0.1

    out = trig_decoder_w(hidden_in, weight, bias)
    out = jax.block_until_ready(out)

    ref = _reference(hidden_in, weight, bias)
    assert out.shape == (B * S, T)
    assert jnp.allclose(out, ref, atol=1e-5, rtol=1e-5), "mismatch vs reference"
    assert bool(jnp.isfinite(out).all()), "non-finite values in valid rows"

    print("KERNEL_OK")
</pallas_src>

<mosaic_0001>
module attributes {stable_mosaic.version = 11 : i64} {
  func.func @_decoder_kernel(%arg0: i32, %arg1: memref<8x32xf32, #tpu.memory_space<vmem>>, %arg2: memref<1024x32xf32, #tpu.memory_space<vmem>>, %arg3: memref<8x1xf32, #tpu.memory_space<vmem>>, %arg4: memref<8x1024xf32, #tpu.memory_space<vmem>>) attributes {dimension_semantics = [#tpu.dimension_semantics<parallel>], iteration_bounds = array<i64: 1>, scalar_prefetch = 0 : i64, scratch_operands = 0 : i64, tpu.core_type = #tpu.core_type<tc>, window_params = [{pipeline_mode = #tpu.pipeline_mode<synchronous>, transform_indices = @transform_0, window_bounds = array<i64: 8, 32>}, {transform_indices = @transform_1, window_bounds = array<i64: 1024, 32>}, {pipeline_mode = #tpu.pipeline_mode<synchronous>, transform_indices = @transform_2, window_bounds = array<i64: 8, 1>}, {transform_indices = @transform_3, window_bounds = array<i64: 8, 1024>}]} {
    %c0 = arith.constant 0 : index
    %c0_0 = arith.constant 0 : index
    %0 = vector.load %arg1[%c0, %c0_0] : memref<8x32xf32, #tpu.memory_space<vmem>>, vector<8x32xf32>
    %c0_1 = arith.constant 0 : index
    %c0_2 = arith.constant 0 : index
    %1 = vector.load %arg2[%c0_1, %c0_2] : memref<1024x32xf32, #tpu.memory_space<vmem>>, vector<1024x32xf32>
    %cst = arith.constant dense<0.000000e+00> : vector<8x1024xf32>
    %2 = tpu.matmul %0, %1, %cst {dimension_numbers = #tpu.dot_dimension_numbers<[1], [1], [0], [0], [0, 0, 1, 0], [], []>} : vector<8x32xf32>, vector<1024x32xf32>, vector<8x1024xf32> -> vector<8x1024xf32>
    %c0_3 = arith.constant 0 : index
    %c0_4 = arith.constant 0 : index
    %3 = vector.load %arg3[%c0_3, %c0_4] : memref<8x1xf32, #tpu.memory_space<vmem>>, vector<8x1xf32>
    %4 = vector.broadcast %3 : vector<8x1xf32> to vector<8x1024xf32>
    %5 = arith.addf %2, %4 : vector<8x1024xf32>
    %cst_5 = arith.constant dense<0xFF800000> : vector<1024xf32>
    %6 = vector.multi_reduction <maximumf>, %5, %cst_5 [0] : vector<8x1024xf32> to vector<1024xf32>
    %7 = vector.shape_cast %6 : vector<1024xf32> to vector<1x1024xf32>
    %8 = vector.broadcast %7 : vector<1x1024xf32> to vector<8x1024xf32>
    %9 = arith.subf %5, %8 : vector<8x1024xf32>
    %10 = math.exp %9 : vector<8x1024xf32>
    %cst_6 = arith.constant dense<0.000000e+00> : vector<1024xf32>
    %11 = vector.multi_reduction <add>, %10, %cst_6 [0] : vector<8x1024xf32> to vector<1024xf32>
    %12 = vector.shape_cast %11 : vector<1024xf32> to vector<1x1024xf32>
    %13 = math.log %12 : vector<1x1024xf32>
    %14 = vector.broadcast %13 : vector<1x1024xf32> to vector<8x1024xf32>
    %15 = arith.subf %9, %14 : vector<8x1024xf32>
    %c0_7 = arith.constant 0 : index
    %c0_8 = arith.constant 0 : index
    %16 = vector.load %arg4[%c0_7, %c0_8] : memref<8x1024xf32, #tpu.memory_space<vmem>>, vector<8x1024xf32>
    tpu.vector_store %arg4[%c0_7, %c0_8], %15 {strides = array<i32>} : memref<8x1024xf32, #tpu.memory_space<vmem>>, vector<8x1024xf32>,
    return
  }
  func.func @transform_0(%arg0: i32) -> (i32, i32) {
    %c0_i32 = arith.constant 0 : i32
    %c0_i32_0 = arith.constant 0 : i32
    %c0_i32_1 = arith.constant 0 : i32
    return %c0_i32, %c0_i32_0 : i32, i32
  }
  func.func @transform_1(%arg0: i32) -> (i32, i32) {
    %c0_i32 = arith.constant 0 : i32
    %c0_i32_0 = arith.constant 0 : i32
    return %arg0, %c0_i32 : i32, i32
  }
  func.func @transform_2(%arg0: i32) -> (i32, i32) {
    %c0_i32 = arith.constant 0 : i32
    %c0_i32_0 = arith.constant 0 : i32
    %c0_i32_1 = arith.constant 0 : i32
    return %c0_i32, %c0_i32_0 : i32, i32
  }
  func.func @transform_3(%arg0: i32) -> (i32, i32) {
    %c0_i32 = arith.constant 0 : i32
    %c0_i32_0 = arith.constant 0 : i32
    return %c0_i32, %arg0 : i32, i32
  }
}

</mosaic_0001>

<llo_original>
// kernel: tpu_custom_call.1
$region0: #{tpu_custom_call.1}
  #allocation0 [shape = 'u32[]', space=smem, size = 0x4, offset = 0x4, fixed_abs, tag = 'smem constant byte address 0x4 - core index']
  #allocation1 [shape = 'u32[144,128]{1,0:T(1,128)}', space=vmem, size = 0x12000, scoped, tag = 'internal scratch']
  %s0 = inlined_call_operand.vmem [shape: f32[8,32], index: 0, kind: input, shape index: {}]
  %s1 = inlined_call_operand.hbm [shape: f32[16,32], index: 1, kind: input, shape index: {}]
  %s2 = inlined_call_operand.vmem [shape: f32[8,1], index: 2, kind: input, shape index: {}]
  %s3 = inlined_call_operand.hbm [shape: f32[8,1024], index: 3, kind: output, shape index: {}]
  %s4 = sld [smem:[#allocation0]]
  $region26: #{tpu_custom_call.1} parent=0
    _
  %s6 = ssub.s32 1, %s4
  %s7 = scalar_select 0, %s6, %s4
  $region1: #{tpu_custom_call.1} parent=0
    #allocation2 [shape = 'u8[524288]{0}', space=vmem, size = 0x80000, scoped, tag = 'input window, operand 1, single buffered']
    #allocation3 [shape = 's32[1]{0}', space=sflag, size = 0x4, scoped, tag = 'scoped memory for tpu_custom_call.1']
    #allocation4 [shape = 's32[1]{0}', space=sflag, size = 0x4, scoped, tag = 'scoped memory for tpu_custom_call.1']
    #allocation5 [shape = 'u8[32768]{0}', space=vmem, size = 0x8000, scoped, tag = 'output window, operand 0, single buffered']
    %8 = vsyncpa [#allocation3], 0
    %9 = vsyncpa [#allocation4], 0
    // Predicated region
    $region2: #{tpu_custom_call.1} parent=1 // pred_check
      _
    $region3: #{tpu_custom_call.1} parent=1 // pred_check_branch
      %11 = sbr.rel (0) target = $region5
    $region4: #{tpu_custom_call.1} parent=1 // pred_region
      _
    $region5: #{tpu_custom_call.1} parent=1 // pred_fallthru
      _
    // Predicated region
    $region6: #{tpu_custom_call.1} parent=1 // pred_check
      _
    $region7: #{tpu_custom_call.1} parent=1 // pred_check_branch
      %13 = sbr.rel (0) target = $region9
    $region8: #{tpu_custom_call.1} parent=1 // pred_region
      %s15 = ssub.s32 16384, 256
      %16 = vsyncadd [#allocation3], %s15
      %s17 = sshll.u32 [#allocation2], 4
      %s18 = int_to_ptr.vmem [resolvable:$true] %s17
      %23 = dma.hbm_to_vmem [thread:$0]  %s1, 256, %s18, [#allocation3], 128, 128, 8
    $region9: #{tpu_custom_call.1} parent=1 // pred_fallthru
      _
    // Predicated region
    $region10: #{tpu_custom_call.1} parent=1 // pred_check
      _
    $region11: #{tpu_custom_call.1} parent=1 // pred_check_branch
      %25 = sbr.rel (0) target = $region13
    $region12: #{tpu_custom_call.1} parent=1 // pred_region
      _
    $region13: #{tpu_custom_call.1} parent=1 // pred_fallthru
      _
    // Predicated region
    $region14: #{tpu_custom_call.1} parent=1 // pred_check
      _
    $region15: #{tpu_custom_call.1} parent=1 // pred_check_branch
      %27 = sbr.rel (0) target = $region17
    $region16: #{tpu_custom_call.1} parent=1 // pred_region
      %28 = dma.done [#allocation3], 16384
    $region17: #{tpu_custom_call.1} parent=1 // pred_fallthru
      _
    %v29 = vld [vmem:[%s0] sm:$0xff]
    %v30 = vld [vmem:[#allocation2] sm:$0xff]
    %v31 = vld [vmem:[#allocation2 + $0x8] sm:$0xff]
    %v32 = vld [vmem:[#allocation2 + $0x10] sm:$0xff]
    %v33 = vld [vmem:[#allocation2 + $0x18] sm:$0xff]
    %v34 = vld [vmem:[#allocation2 + $0x20] sm:$0xff]
    %v35 = vld [vmem:[#allocation2 + $0x28] sm:$0xff]
    %v36 = vld [vmem:[#allocation2 + $0x30] sm:$0xff]
    %v37 = vld [vmem:[#allocation2 + $0x38] sm:$0xff]
    %v38 = vld [vmem:[#allocation2 + $0x40] sm:$0xff]
    %v39 = vld [vmem:[#allocation2 + $0x48] sm:$0xff]
    %v40 = vld [vmem:[#allocation2 + $0x50] sm:$0xff]
    %v41 = vld [vmem:[#allocation2 + $0x58] sm:$0xff]
    %v42 = vld [vmem:[#allocation2 + $0x60] sm:$0xff]
    %v43 = vld [vmem:[#allocation2 + $0x68] sm:$0xff]
    %v44 = vld [vmem:[#allocation2 + $0x70] sm:$0xff]
    %v45 = vld [vmem:[#allocation2 + $0x78] sm:$0xff]
    %v46 = vld [vmem:[#allocation2 + $0x80] sm:$0xff]
    %v47 = vld [vmem:[#allocation2 + $0x88] sm:$0xff]
    %v48 = vld [vmem:[#allocation2 + $0x90] sm:$0xff]
    %v49 = vld [vmem:[#allocation2 + $0x98] sm:$0xff]
    %v50 = vld [vmem:[#allocation2 + $0xa0] sm:$0xff]
    %v51 = vld [vmem:[#allocation2 + $0xa8] sm:$0xff]
    %v52 = vld [vmem:[#allocation2 + $0xb0] sm:$0xff]
    %v53 = vld [vmem:[#allocation2 + $0xb8] sm:$0xff]
    %v54 = vld [vmem:[#allocation2 + $0xc0] sm:$0xff]
    %v55 = vld [vmem:[#allocation2 + $0xc8] sm:$0xff]
    %v56 = vld [vmem:[#allocation2 + $0xd0] sm:$0xff]
    %v57 = vld [vmem:[#allocation2 + $0xd8] sm:$0xff]
    %v58 = vld [vmem:[#allocation2 + $0xe0] sm:$0xff]
    %v59 = vld [vmem:[#allocation2 + $0xe8] sm:$0xff]
    %v60 = vld [vmem:[#allocation2 + $0xf0] sm:$0xff]
    %v61 = vld [vmem:[#allocation2 + $0xf8] sm:$0xff]
    %v62 = vld [vmem:[#allocation2 + $0x100] sm:$0xff]
    %v63 = vld [vmem:[#allocation2 + $0x108] sm:$0xff]
    %v64 = vld [vmem:[#allocation2 + $0x110] sm:$0xff]
    %v65 = vld [vmem:[#allocation2 + $0x118] sm:$0xff]
    %v66 = vld [vmem:[#allocation2 + $0x120] sm:$0xff]
    %v67 = vld [vmem:[#allocation2 + $0x128] sm:$0xff]
    %v68 = vld [vmem:[#allocation2 + $0x130] sm:$0xff]
    %v69 = vld [vmem:[#allocation2 + $0x138] sm:$0xff]
    %v70 = vld [vmem:[#allocation2 + $0x140] sm:$0xff]
    %v71 = vld [vmem:[#allocation2 + $0x148] sm:$0xff]
    %v72 = vld [vmem:[#allocation2 + $0x150] sm:$0xff]
    %v73 = vld [vmem:[#allocation2 + $0x158] sm:$0xff]
    %v74 = vld [vmem:[#allocation2 + $0x160] sm:$0xff]
    %v75 = vld [vmem:[#allocation2 + $0x168] sm:$0xff]
    %v76 = vld [vmem:[#allocation2 + $0x170] sm:$0xff]
    %v77 = vld [vmem:[#allocation2 + $0x178] sm:$0xff]
    %v78 = vld [vmem:[#allocation2 + $0x180] sm:$0xff]
    %v79 = vld [vmem:[#allocation2 + $0x188] sm:$0xff]
    %v80 = vld [vmem:[#allocation2 + $0x190] sm:$0xff]
    %v81 = vld [vmem:[#allocation2 + $0x198] sm:$0xff]
    %v82 = vld [vmem:[#allocation2 + $0x1a0] sm:$0xff]
    %v83 = vld [vmem:[#allocation2 + $0x1a8] sm:$0xff]
    %v84 = vld [vmem:[#allocation2 + $0x1b0] sm:$0xff]
    %v85 = vld [vmem:[#allocation2 + $0x1b8] sm:$0xff]
    %v86 = vld [vmem:[#allocation2 + $0x1c0] sm:$0xff]
    %v87 = vld [vmem:[#allocation2 + $0x1c8] sm:$0xff]
    %v88 = vld [vmem:[#allocation2 + $0x1d0] sm:$0xff]
    %v89 = vld [vmem:[#allocation2 + $0x1d8] sm:$0xff]
    %v90 = vld [vmem:[#allocation2 + $0x1e0] sm:$0xff]
    %v91 = vld [vmem:[#allocation2 + $0x1e8] sm:$0xff]
    %v92 = vld [vmem:[#allocation2 + $0x1f0] sm:$0xff]
    %v93 = vld [vmem:[#allocation2 + $0x1f8] sm:$0xff]
    %v94 = vld [vmem:[#allocation2 + $0x200] sm:$0xff]
    %v95 = vld [vmem:[#allocation2 + $0x208] sm:$0xff]
    %v96 = vld [vmem:[#allocation2 + $0x210] sm:$0xff]
    %v97 = vld [vmem:[#allocation2 + $0x218] sm:$0xff]
    %v98 = vld [vmem:[#allocation2 + $0x220] sm:$0xff]
    %v99 = vld [vmem:[#allocation2 + $0x228] sm:$0xff]
    %v100 = vld [vmem:[#allocation2 + $0x230] sm:$0xff]
    %v101 = vld [vmem:[#allocation2 + $0x238] sm:$0xff]
    %v102 = vld [vmem:[#allocation2 + $0x240] sm:$0xff]
    %v103 = vld [vmem:[#allocation2 + $0x248] sm:$0xff]
    %v104 = vld [vmem:[#allocation2 + $0x250] sm:$0xff]
    %v105 = vld [vmem:[#allocation2 + $0x258] sm:$0xff]
    %v106 = vld [vmem:[#allocation2 + $0x260] sm:$0xff]
    %v107 = vld [vmem:[#allocation2 + $0x268] sm:$0xff]
    %v108 = vld [vmem:[#allocation2 + $0x270] sm:$0xff]
    %v109 = vld [vmem:[#allocation2 + $0x278] sm:$0xff]
    %v110 = vld [vmem:[#allocation2 + $0x280] sm:$0xff]
    %v111 = vld [vmem:[#allocation2 + $0x288] sm:$0xff]
    %v112 = vld [vmem:[#allocation2 + $0x290] sm:$0xff]
    %v113 = vld [vmem:[#allocation2 + $0x298] sm:$0xff]
    %v114 = vld [vmem:[#allocation2 + $0x2a0] sm:$0xff]
    %v115 = vld [vmem:[#allocation2 + $0x2a8] sm:$0xff]
    %v116 = vld [vmem:[#allocation2 + $0x2b0] sm:$0xff]
    %v117 = vld [vmem:[#allocation2 + $0x2b8] sm:$0xff]
    %v118 = vld [vmem:[#allocation2 + $0x2c0] sm:$0xff]
    %v119 = vld [vmem:[#allocation2 + $0x2c8] sm:$0xff]
    %v120 = vld [vmem:[#allocation2 + $0x2d0] sm:$0xff]
    %v121 = vld [vmem:[#allocation2 + $0x2d8] sm:$0xff]
    %v122 = vld [vmem:[#allocation2 + $0x2e0] sm:$0xff]
    %v123 = vld [vmem:[#allocation2 + $0x2e8] sm:$0xff]
    %v124 = vld [vmem:[#allocation2 + $0x2f0] sm:$0xff]
    %v125 = vld [vmem:[#allocation2 + $0x2f8] sm:$0xff]
    %v126 = vld [vmem:[#allocation2 + $0x300] sm:$0xff]
    %v127 = vld [vmem:[#allocation2 + $0x308] sm:$0xff]
    %v128 = vld [vmem:[#allocation2 + $0x310] sm:$0xff]
    %v129 = vld [vmem:[#allocation2 + $0x318] sm:$0xff]
    %v130 = vld [vmem:[#allocation2 + $0x320] sm:$0xff]
    %v131 = vld [vmem:[#allocation2 + $0x328] sm:$0xff]
    %v132 = vld [vmem:[#allocation2 + $0x330] sm:$0xff]
    %v133 = vld [vmem:[#allocation2 + $0x338] sm:$0xff]
    %v134 = vld [vmem:[#allocation2 + $0x340] sm:$0xff]
    %v135 = vld [vmem:[#allocation2 + $0x348] sm:$0xff]
    %v136 = vld [vmem:[#allocation2 + $0x350] sm:$0xff]
    %v137 = vld [vmem:[#allocation2 + $0x358] sm:$0xff]
    %v138 = vld [vmem:[#allocation2 + $0x360] sm:$0xff]
    %v139 = vld [vmem:[#allocation2 + $0x368] sm:$0xff]
    %v140 = vld [vmem:[#allocation2 + $0x370] sm:$0xff]
    %v141 = vld [vmem:[#allocation2 + $0x378] sm:$0xff]
    %v142 = vld [vmem:[#allocation2 + $0x380] sm:$0xff]
    %v143 = vld [vmem:[#allocation2 + $0x388] sm:$0xff]
    %v144 = vld [vmem:[#allocation2 + $0x390] sm:$0xff]
    %v145 = vld [vmem:[#allocation2 + $0x398] sm:$0xff]
    %v146 = vld [vmem:[#allocation2 + $0x3a0] sm:$0xff]
    %v147 = vld [vmem:[#allocation2 + $0x3a8] sm:$0xff]
    %v148 = vld [vmem:[#allocation2 + $0x3b0] sm:$0xff]
    %v149 = vld [vmem:[#allocation2 + $0x3b8] sm:$0xff]
    %v150 = vld [vmem:[#allocation2 + $0x3c0] sm:$0xff]
    %v151 = vld [vmem:[#allocation2 + $0x3c8] sm:$0xff]
    %v152 = vld [vmem:[#allocation2 + $0x3d0] sm:$0xff]
    %v153 = vld [vmem:[#allocation2 + $0x3d8] sm:$0xff]
    %v154 = vld [vmem:[#allocation2 + $0x3e0] sm:$0xff]
    %v155 = vld [vmem:[#allocation2 + $0x3e8] sm:$0xff]
    %v156 = vld [vmem:[#allocation2 + $0x3f0] sm:$0xff]
    %v157 = vld [vmem:[#allocation2 + $0x3f8] sm:$0xff]
    %v158 = vld [vmem:[%s2] sm:$0xff]
    %160 = vset.pattern.permute.xlu0 0
    %161 = vperm.xlu0 %160, %v158
    %v162 = vpop.permute.xlu0 %161
    %vm164 = vcmask 261120
    %v166 = vsel %vm164, %v29, 0
    %v169 = vsel %vm164, %v30, 0
    %v172 = vsel %vm164, %v31, 0
    %v175 = vsel %vm164, %v32, 0
    %v178 = vsel %vm164, %v33, 0
    %v181 = vsel %vm164, %v34, 0
    %v184 = vsel %vm164, %v35, 0
    %v187 = vsel %vm164, %v36, 0
    %v190 = vsel %vm164, %v37, 0
    %v193 = vsel %vm164, %v38, 0
    %v196 = vsel %vm164, %v39, 0
    %v199 = vsel %vm164, %v40, 0
    %v202 = vsel %vm164, %v41, 0
    %v205 = vsel %vm164, %v42, 0
    %v208 = vsel %vm164, %v43, 0
    %v211 = vsel %vm164, %v44, 0
    %v214 = vsel %vm164, %v45, 0
    %v217 = vsel %vm164, %v46, 0
    %v220 = vsel %vm164, %v47, 0
    %v223 = vsel %vm164, %v48, 0
    %v226 = vsel %vm164, %v49, 0
    %v229 = vsel %vm164, %v50, 0
    %v232 = vsel %vm164, %v51, 0
    %v235 = vsel %vm164, %v52, 0
    %v238 = vsel %vm164, %v53, 0
    %v241 = vsel %vm164, %v54, 0
    %v244 = vsel %vm164, %v55, 0
    %v247 = vsel %vm164, %v56, 0
    %v250 = vsel %vm164, %v57, 0
    %v253 = vsel %vm164, %v58, 0
    %v256 = vsel %vm164, %v59, 0
    %v259 = vsel %vm164, %v60, 0
    %v262 = vsel %vm164, %v61, 0
    %v265 = vsel %vm164, %v62, 0
    %v268 = vsel %vm164, %v63, 0
    %v271 = vsel %vm164, %v64, 0
    %v274 = vsel %vm164, %v65, 0
    %v277 = vsel %vm164, %v66, 0
    %v280 = vsel %vm164, %v67, 0
    %v283 = vsel %vm164, %v68, 0
    %v286 = vsel %vm164, %v69, 0
    %v289 = vsel %vm164, %v70, 0
    %v292 = vsel %vm164, %v71, 0
    %v295 = vsel %vm164, %v72, 0
    %v298 = vsel %vm164, %v73, 0
    %v301 = vsel %vm164, %v74, 0
    %v304 = vsel %vm164, %v75, 0
    %v307 = vsel %vm164, %v76, 0
    %v310 = vsel %vm164, %v77, 0
    %v313 = vsel %vm164, %v78, 0
    %v316 = vsel %vm164, %v79, 0
    %v319 = vsel %vm164, %v80, 0
    %v322 = vsel %vm164, %v81, 0
    %v325 = vsel %vm164, %v82, 0
    %v328 = vsel %vm164, %v83, 0
    %v331 = vsel %vm164, %v84, 0
    %v334 = vsel %vm164, %v85, 0
    %v337 = vsel %vm164, %v86, 0
    %v340 = vsel %vm164, %v87, 0
    %v343 = vsel %vm164, %v88, 0
    %v346 = vsel %vm164, %v89, 0
    %v349 = vsel %vm164, %v90, 0
    %v352 = vsel %vm164, %v91, 0
    %v355 = vsel %vm164, %v92, 0
    %v358 = vsel %vm164, %v93, 0
    %v361 = vsel %vm164, %v94, 0
    %v364 = vsel %vm164, %v95, 0
    %v367 = vsel %vm164, %v96, 0
    %v370 = vsel %vm164, %v97, 0
    %v373 = vsel %vm164, %v98, 0
    %v376 = vsel %vm164, %v99, 0
    %v379 = vsel %vm164, %v100, 0
    %v382 = vsel %vm164, %v101, 0
    %v385 = vsel %vm164, %v102, 0
    %v388 = vsel %vm164, %v103, 0
    %v391 = vsel %vm164, %v104, 0
    %v394 = vsel %vm164, %v105, 0
    %v397 = vsel %vm164, %v106, 0
    %v400 = vsel %vm164, %v107, 0
    %v403 = vsel %vm164, %v108, 0
    %v406 = vsel %vm164, %v109, 0
    %v409 = vsel %vm164, %v110, 0
    %v412 = vsel %vm164, %v111, 0
    %v415 = vsel %vm164, %v112, 0
    %v418 = vsel %vm164, %v113, 0
    %v421 = vsel %vm164, %v114, 0
    %v424 = vsel %vm164, %v115, 0
    %v427 = vsel %vm164, %v116, 0
    %v430 = vsel %vm164, %v117, 0
    %v433 = vsel %vm164, %v118, 0
    %v436 = vsel %vm164, %v119, 0
    %v439 = vsel %vm164, %v120, 0
    %v442 = vsel %vm164, %v121, 0
    %v445 = vsel %vm164, %v122, 0
    %v448 = vsel %vm164, %v123, 0
    %v451 = vsel %vm164, %v124, 0
    %v454 = vsel %vm164, %v125, 0
    %v457 = vsel %vm164, %v126, 0
    %v460 = vsel %vm164, %v127, 0
    %v463 = vsel %vm164, %v128, 0
    %v466 = vsel %vm164, %v129, 0
    %v469 = vsel %vm164, %v130, 0
    %v472 = vsel %vm164, %v131, 0
    %v475 = vsel %vm164, %v132, 0
    %v478 = vsel %vm164, %v133, 0
    %v481 = vsel %vm164, %v134, 0
    %v484 = vsel %vm164, %v135, 0
    %v487 = vsel %vm164, %v136, 0
    %v490 = vsel %vm164, %v137, 0
    %v493 = vsel %vm164, %v138, 0
    %v496 = vsel %vm164, %v139, 0
    %v499 = vsel %vm164, %v140, 0
    %v502 = vsel %vm164, %v141, 0
    %v505 = vsel %vm164, %v142, 0
    %v508 = vsel %vm164, %v143, 0
    %v511 = vsel %vm164, %v144, 0
    %v514 = vsel %vm164, %v145, 0
    %v517 = vsel %vm164, %v146, 0
    %v520 = vsel %vm164, %v147, 0
    %v523 = vsel %vm164, %v148, 0
    %v526 = vsel %vm164, %v149, 0
    %v529 = vsel %vm164, %v150, 0
    %v532 = vsel %vm164, %v151, 0
    %v535 = vsel %vm164, %v152, 0
    %v538 = vsel %vm164, %v153, 0
    %v541 = vsel %vm164, %v154, 0
    %v544 = vsel %vm164, %v155, 0
    %v547 = vsel %vm164, %v156, 0
    %v550 = vsel %vm164, %v157, 0
    %552 = vmatprep.subr.mxu0 0.0
    %553 = vmatpush1.xpose.msra.mxu0 %v214
    %554 = vmatprep.subr.mxu0 0.0
    %555 = vmatpush1.xpose.msra.mxu0 %v211
    %556 = vmatprep.subr.mxu0 0.0
    %557 = vmatpush1.xpose.msra.mxu0 %v208
    %558 = vmatprep.subr.mxu0 0.0
    %559 = vmatpush1.xpose.msra.mxu0 %v205
    %560 = vmatprep.subr.mxu0 0.0
    %561 = vmatpush1.xpose.msra.mxu0 %v202
    %562 = vmatprep.subr.mxu0 0.0
    %563 = vmatpush1.xpose.msra.mxu0 %v199
    %564 = vmatprep.subr.mxu0 0.0
    %565 = vmatpush1.xpose.msra.mxu0 %v196
    %566 = vmatprep.subr.mxu0 0.0
    %567 = vmatpush1.xpose.msra.mxu0 %v193
    %568 = vmatprep.subr.mxu0 0.0
    %569 = vmatpush1.xpose.msra.mxu0 %v190
    %570 = vmatprep.subr.mxu0 0.0
    %571 = vmatpush1.xpose.msra.mxu0 %v187
    %572 = vmatprep.subr.mxu0 0.0
    %573 = vmatpush1.xpose.msra.mxu0 %v184
    %574 = vmatprep.subr.mxu0 0.0
    %575 = vmatpush1.xpose.msra.mxu0 %v181
    %576 = vmatprep.subr.mxu0 0.0
    %577 = vmatpush1.xpose.msra.mxu0 %v178
    %578 = vmatprep.subr.mxu0 0.0
    %579 = vmatpush1.xpose.msra.mxu0 %v175
    %580 = vmatprep.subr.mxu0 0.0
    %581 = vmatpush1.xpose.msra.mxu0 %v172
    %582 = vmatprep.subr.mxu0 0.0
    %583 = vmatpush1.xpose.msra.mxu0 %v169
    %584 = vmatprep.subr.mxu0 0.0
    %585 = vmatpush2.xpose.msra.mxu0 %v262
    %586 = vmatprep.subr.mxu0 0.0
    %587 = vmatpush2.xpose.msra.mxu0 %v259
    %588 = vmatprep.subr.mxu0 0.0
    %589 = vmatpush2.xpose.msra.mxu0 %v256
    %590 = vmatprep.subr.mxu0 0.0
    %591 = vmatpush2.xpose.msra.mxu0 %v253
    %592 = vmatprep.subr.mxu0 0.0
    %593 = vmatpush2.xpose.msra.mxu0 %v250
    %594 = vmatprep.subr.mxu0 0.0
    %595 = vmatpush2.xpose.msra.mxu0 %v247
    %596 = vmatprep.subr.mxu0 0.0
    %597 = vmatpush2.xpose.msra.mxu0 %v244
    %598 = vmatprep.subr.mxu0 0.0
    %599 = vmatpush2.xpose.msra.mxu0 %v241
    %600 = vmatprep.subr.mxu0 0.0
    %601 = vmatpush2.xpose.msra.mxu0 %v238
    %602 = vmatprep.subr.mxu0 0.0
    %603 = vmatpush2.xpose.msra.mxu0 %v235
    %604 = vmatprep.subr.mxu0 0.0
    %605 = vmatpush2.xpose.msra.mxu0 %v232
    %606 = vmatprep.subr.mxu0 0.0
    %607 = vmatpush2.xpose.msra.mxu0 %v229
    %608 = vmatprep.subr.mxu0 0.0
    %609 = vmatpush2.xpose.msra.mxu0 %v226
    %610 = vmatprep.subr.mxu0 0.0
    %611 = vmatpush2.xpose.msra.mxu0 %v223
    %612 = vmatprep.subr.mxu0 0.0
    %613 = vmatpush2.xpose.msra.mxu0 %v220
    %614 = vmatprep.subr.mxu0 0.0
    %615 = vmatpush2.xpose.msra.mxu0 %v217
    %616 = vmatprep.mubr.f32.mxu0 0.0
    %617 = vmatmul.mubr.f32.gmra.mxu0 %v166
    %v618 = vpop.f32.mrf.mxu0
    %v619 = vadd.f32 %v162, %v618
    %v620 = vpop.f32.mrf.mxu0
    %v621 = vadd.f32 %v162, %v620
    %622 = vdwg.mxu0
    %623 = vmatprep.subr.mxu0 0.0
    %624 = vmatpush1.xpose.msra.mxu0 %v310
    %625 = vmatprep.subr.mxu0 0.0
    %626 = vmatpush1.xpose.msra.mxu0 %v307
    %627 = vmatprep.subr.mxu0 0.0
    %628 = vmatpush1.xpose.msra.mxu0 %v304
    %629 = vmatprep.subr.mxu0 0.0
    %630 = vmatpush1.xpose.msra.mxu0 %v301
    %631 = vmatprep.subr.mxu0 0.0
    %632 = vmatpush1.xpose.msra.mxu0 %v298
    %633 = vmatprep.subr.mxu0 0.0
    %634 = vmatpush1.xpose.msra.mxu0 %v295
    %635 = vmatprep.subr.mxu0 0.0
    %636 = vmatpush1.xpose.msra.mxu0 %v292
    %637 = vmatprep.subr.mxu0 0.0
    %638 = vmatpush1.xpose.msra.mxu0 %v289
    %639 = vmatprep.subr.mxu0 0.0
    %640 = vmatpush1.xpose.msra.mxu0 %v286
    %641 = vmatprep.subr.mxu0 0.0
    %642 = vmatpush1.xpose.msra.mxu0 %v283
    %643 = vmatprep.subr.mxu0 0.0
    %644 = vmatpush1.xpose.msra.mxu0 %v280
    %645 = vmatprep.subr.mxu0 0.0
    %646 = vmatpush1.xpose.msra.mxu0 %v277
    %647 = vmatprep.subr.mxu0 0.0
    %648 = vmatpush1.xpose.msra.mxu0 %v274
    %649 = vmatprep.subr.mxu0 0.0
    %650 = vmatpush1.xpose.msra.mxu0 %v271
    %651 = vmatprep.subr.mxu0 0.0
    %652 = vmatpush1.xpose.msra.mxu0 %v268
    %653 = vmatprep.subr.mxu0 0.0
    %654 = vmatpush1.xpose.msra.mxu0 %v265
    %655 = vmatprep.subr.mxu0 0.0
    %656 = vmatpush2.xpose.msra.mxu0 %v358
    %657 = vmatprep.subr.mxu0 0.0
    %658 = vmatpush2.xpose.msra.mxu0 %v355
    %659 = vmatprep.subr.mxu0 0.0
    %660 = vmatpush2.xpose.msra.mxu0 %v352
    %661 = vmatprep.subr.mxu0 0.0
    %662 = vmatpush2.xpose.msra.mxu0 %v349
    %663 = vmatprep.subr.mxu0 0.0
    %664 = vmatpush2.xpose.msra.mxu0 %v346
    %665 = vmatprep.subr.mxu0 0.0
    %666 = vmatpush2.xpose.msra.mxu0 %v343
    %667 = vmatprep.subr.mxu0 0.0
    %668 = vmatpush2.xpose.msra.mxu0 %v340
    %669 = vmatprep.subr.mxu0 0.0
    %670 = vmatpush2.xpose.msra.mxu0 %v337
    %671 = vmatprep.subr.mxu0 0.0
    %672 = vmatpush2.xpose.msra.mxu0 %v334
    %673 = vmatprep.subr.mxu0 0.0
    %674 = vmatpush2.xpose.msra.mxu0 %v331
    %675 = vmatprep.subr.mxu0 0.0
    %676 = vmatpush2.xpose.msra.mxu0 %v328
    %677 = vmatprep.subr.mxu0 0.0
    %678 = vmatpush2.xpose.msra.mxu0 %v325
    %679 = vmatprep.subr.mxu0 0.0
    %680 = vmatpush2.xpose.msra.mxu0 %v322
    %681 = vmatprep.subr.mxu0 0.0
    %682 = vmatpush2.xpose.msra.mxu0 %v319
    %683 = vmatprep.subr.mxu0 0.0
    %684 = vmatpush2.xpose.msra.mxu0 %v316
    %685 = vmatprep.subr.mxu0 0.0
    %686 = vmatpush2.xpose.msra.mxu0 %v313
    %687 = vmatprep.mubr.f32.mxu0 0.0
    %688 = vmatmul.mubr.f32.gmra.mxu0 %v166
    %v689 = vpop.f32.mrf.mxu0
    %v690 = vadd.f32 %v162, %v689
    %v691 = vpop.f32.mrf.mxu0
    %v692 = vadd.f32 %v162, %v691
    %693 = vdwg.mxu0
    %694 = vmatprep.subr.mxu0 0.0
    %695 = vmatpush1.xpose.msra.mxu0 %v406
    %696 = vmatprep.subr.mxu0 0.0
    %697 = vmatpush1.xpose.msra.mxu0 %v403
    %698 = vmatprep.subr.mxu0 0.0
    %699 = vmatpush1.xpose.msra.mxu0 %v400
    %700 = vmatprep.subr.mxu0 0.0
    %701 = vmatpush1.xpose.msra.mxu0 %v397
    %702 = vmatprep.subr.mxu0 0.0
    %703 = vmatpush1.xpose.msra.mxu0 %v394
    %704 = vmatprep.subr.mxu0 0.0
    %705 = vmatpush1.xpose.msra.mxu0 %v391
    %706 = vmatprep.subr.mxu0 0.0
    %707 = vmatpush1.xpose.msra.mxu0 %v388
    %708 = vmatprep.subr.mxu0 0.0
    %709 = vmatpush1.xpose.msra.mxu0 %v385
    %710 = vmatprep.subr.mxu0 0.0
    %711 = vmatpush1.xpose.msra.mxu0 %v382
    %712 = vmatprep.subr.mxu0 0.0
    %713 = vmatpush1.xpose.msra.mxu0 %v379
    %714 = vmatprep.subr.mxu0 0.0
    %715 = vmatpush1.xpose.msra.mxu0 %v376
    %716 = vmatprep.subr.mxu0 0.0
    %717 = vmatpush1.xpose.msra.mxu0 %v373
    %718 = vmatprep.subr.mxu0 0.0
    %719 = vmatpush1.xpose.msra.mxu0 %v370
    %720 = vmatprep.subr.mxu0 0.0
    %721 = vmatpush1.xpose.msra.mxu0 %v367
    %722 = vmatprep.subr.mxu0 0.0
    %723 = vmatpush1.xpose.msra.mxu0 %v364
    %724 = vmatprep.subr.mxu0 0.0
    %725 = vmatpush1.xpose.msra.mxu0 %v361
    %726 = vmatprep.subr.mxu0 0.0
    %727 = vmatpush2.xpose.msra.mxu0 %v454
    %728 = vmatprep.subr.mxu0 0.0
    %729 = vmatpush2.xpose.msra.mxu0 %v451
    %730 = vmatprep.subr.mxu0 0.0
    %731 = vmatpush2.xpose.msra.mxu0 %v448
    %732 = vmatprep.subr.mxu0 0.0
    %733 = vmatpush2.xpose.msra.mxu0 %v445
    %734 = vmatprep.subr.mxu0 0.0
    %735 = vmatpush2.xpose.msra.mxu0 %v442
    %736 = vmatprep.subr.mxu0 0.0
    %737 = vmatpush2.xpose.msra.mxu0 %v439
    %738 = vmatprep.subr.mxu0 0.0
    %739 = vmatpush2.xpose.msra.mxu0 %v436
    %740 = vmatprep.subr.mxu0 0.0
    %741 = vmatpush2.xpose.msra.mxu0 %v433
    %742 = vmatprep.subr.mxu0 0.0
    %743 = vmatpush2.xpose.msra.mxu0 %v430
    %744 = vmatprep.subr.mxu0 0.0
    %745 = vmatpush2.xpose.msra.mxu0 %v427
    %746 = vmatprep.subr.mxu0 0.0
    %747 = vmatpush2.xpose.msra.mxu0 %v424
    %748 = vmatprep.subr.mxu0 0.0
    %749 = vmatpush2.xpose.msra.mxu0 %v421
    %750 = vmatprep.subr.mxu0 0.0
    %751 = vmatpush2.xpose.msra.mxu0 %v418
    %752 = vmatprep.subr.mxu0 0.0
    %753 = vmatpush2.xpose.msra.mxu0 %v415
    %754 = vmatprep.subr.mxu0 0.0
    %755 = vmatpush2.xpose.msra.mxu0 %v412
    %756 = vmatprep.subr.mxu0 0.0
    %757 = vmatpush2.xpose.msra.mxu0 %v409
    %758 = vmatprep.mubr.f32.mxu0 0.0
    %759 = vmatmul.mubr.f32.gmra.mxu0 %v166
    %v760 = vpop.f32.mrf.mxu0
    %v761 = vadd.f32 %v162, %v760
    %v762 = vpop.f32.mrf.mxu0
    %v763 = vadd.f32 %v162, %v762
    %764 = vdwg.mxu0
    %765 = vmatprep.subr.mxu0 0.0
    %766 = vmatpush1.xpose.msra.mxu0 %v502
    %767 = vmatprep.subr.mxu0 0.0
    %768 = vmatpush1.xpose.msra.mxu0 %v499
    %769 = vmatprep.subr.mxu0 0.0
    %770 = vmatpush1.xpose.msra.mxu0 %v496
    %771 = vmatprep.subr.mxu0 0.0
    %772 = vmatpush1.xpose.msra.mxu0 %v493
    %773 = vmatprep.subr.mxu0 0.0
    %774 = vmatpush1.xpose.msra.mxu0 %v490
    %775 = vmatprep.subr.mxu0 0.0
    %776 = vmatpush1.xpose.msra.mxu0 %v487
    %777 = vmatprep.subr.mxu0 0.0
    %778 = vmatpush1.xpose.msra.mxu0 %v484
    %779 = vmatprep.subr.mxu0 0.0
    %780 = vmatpush1.xpose.msra.mxu0 %v481
    %781 = vmatprep.subr.mxu0 0.0
    %782 = vmatpush1.xpose.msra.mxu0 %v478
    %783 = vmatprep.subr.mxu0 0.0
    %784 = vmatpush1.xpose.msra.mxu0 %v475
    %785 = vmatprep.subr.mxu0 0.0
    %786 = vmatpush1.xpose.msra.mxu0 %v472
    %787 = vmatprep.subr.mxu0 0.0
    %788 = vmatpush1.xpose.msra.mxu0 %v469
    %789 = vmatprep.subr.mxu0 0.0
    %790 = vmatpush1.xpose.msra.mxu0 %v466
    %791 = vmatprep.subr.mxu0 0.0
    %792 = vmatpush1.xpose.msra.mxu0 %v463
    %793 = vmatprep.subr.mxu0 0.0
    %794 = vmatpush1.xpose.msra.mxu0 %v460
    %795 = vmatprep.subr.mxu0 0.0
    %796 = vmatpush1.xpose.msra.mxu0 %v457
    %797 = vmatprep.subr.mxu0 0.0
    %798 = vmatpush2.xpose.msra.mxu0 %v550
    %799 = vmatprep.subr.mxu0 0.0
    %800 = vmatpush2.xpose.msra.mxu0 %v547
    %801 = vmatprep.subr.mxu0 0.0
    %802 = vmatpush2.xpose.msra.mxu0 %v544
    %803 = vmatprep.subr.mxu0 0.0
    %804 = vmatpush2.xpose.msra.mxu0 %v541
    %805 = vmatprep.subr.mxu0 0.0
    %806 = vmatpush2.xpose.msra.mxu0 %v538
    %807 = vmatprep.subr.mxu0 0.0
    %808 = vmatpush2.xpose.msra.mxu0 %v535
    %809 = vmatprep.subr.mxu0 0.0
    %810 = vmatpush2.xpose.msra.mxu0 %v532
    %811 = vmatprep.subr.mxu0 0.0
    %812 = vmatpush2.xpose.msra.mxu0 %v529
    %813 = vmatprep.subr.mxu0 0.0
    %814 = vmatpush2.xpose.msra.mxu0 %v526
    %815 = vmatprep.subr.mxu0 0.0
    %816 = vmatpush2.xpose.msra.mxu0 %v523
    %817 = vmatprep.subr.mxu0 0.0
    %818 = vmatpush2.xpose.msra.mxu0 %v520
    %819 = vmatprep.subr.mxu0 0.0
    %820 = vmatpush2.xpose.msra.mxu0 %v517
    %821 = vmatprep.subr.mxu0 0.0
    %822 = vmatpush2.xpose.msra.mxu0 %v514
    %823 = vmatprep.subr.mxu0 0.0
    %824 = vmatpush2.xpose.msra.mxu0 %v511
    %825 = vmatprep.subr.mxu0 0.0
    %826 = vmatpush2.xpose.msra.mxu0 %v508
    %827 = vmatprep.subr.mxu0 0.0
    %828 = vmatpush2.xpose.msra.mxu0 %v505
    %829 = vmatprep.mubr.f32.mxu0 0.0
    %830 = vmatmul.mubr.f32.gmra.mxu0 %v166
    %v831 = vpop.f32.mrf.mxu0
    %v832 = vadd.f32 %v162, %v831
    %v833 = vpop.f32.mrf.mxu0
    %v834 = vadd.f32 %v162, %v833
    %835 = vdwg.mxu0
    %v836 = vrot.slane %v619, 4
    %v837 = vmax.f32 %v619, %v836
    %v838 = vrot.slane %v837, 2
    %v839 = vmax.f32 %v837, %v838
    %v840 = vrot.slane %v839, 1
    %v841 = vmax.f32 %v839, %v840
    %v842 = vrot.slane %v621, 4
    %v843 = vmax.f32 %v621, %v842
    %v844 = vrot.slane %v843, 2
    %v845 = vmax.f32 %v843, %v844
    %v846 = vrot.slane %v845, 1
    %v847 = vmax.f32 %v845, %v846
    %v848 = vrot.slane %v690, 4
    %v849 = vmax.f32 %v690, %v848
    %v850 = vrot.slane %v849, 2
    %v851 = vmax.f32 %v849, %v850
    %v852 = vrot.slane %v851, 1
    %v853 = vmax.f32 %v851, %v852
    %v854 = vrot.slane %v692, 4
    %v855 = vmax.f32 %v692, %v854
    %v856 = vrot.slane %v855, 2
    %v857 = vmax.f32 %v855, %v856
    %v858 = vrot.slane %v857, 1
    %v859 = vmax.f32 %v857, %v858
    %v860 = vrot.slane %v761, 4
    %v861 = vmax.f32 %v761, %v860
    %v862 = vrot.slane %v861, 2
    %v863 = vmax.f32 %v861, %v862
    %v864 = vrot.slane %v863, 1
    %v865 = vmax.f32 %v863, %v864
    %v866 = vrot.slane %v763, 4
    %v867 = vmax.f32 %v763, %v866
    %v868 = vrot.slane %v867, 2
    %v869 = vmax.f32 %v867, %v868
    %v870 = vrot.slane %v869, 1
    %v871 = vmax.f32 %v869, %v870
    %v872 = vrot.slane %v832, 4
    %v873 = vmax.f32 %v832, %v872
    %v874 = vrot.slane %v873, 2
    %v875 = vmax.f32 %v873, %v874
    %v876 = vrot.slane %v875, 1
    %v877 = vmax.f32 %v875, %v876
    %v878 = vrot.slane %v834, 4
    %v879 = vmax.f32 %v834, %v878
    %v880 = vrot.slane %v879, 2
    %v881 = vmax.f32 %v879, %v880
    %v882 = vrot.slane %v881, 1
    %v883 = vmax.f32 %v881, %v882
    %v884 = vsub.f32 %v619, %v841
    %v885 = vsub.f32 %v621, %v847
    %v886 = vsub.f32 %v690, %v853
    %v887 = vsub.f32 %v692, %v859
    %v888 = vsub.f32 %v761, %v865
    %v889 = vsub.f32 %v763, %v871
    %v890 = vsub.f32 %v832, %v877
    %v891 = vsub.f32 %v834, %v883
    %v892 = vmul.f32 %v884, 1.442695
    %v893 = vpow.pop %v892
    %v894 = vmul.f32 %v885, 1.442695
    %v895 = vpow.pop %v894
    %v896 = vmul.f32 %v886, 1.442695
    %v897 = vpow.pop %v896
    %v898 = vmul.f32 %v887, 1.442695
    %v899 = vpow.pop %v898
    %v900 = vmul.f32 %v888, 1.442695
    %v901 = vpow.pop %v900
    %v902 = vmul.f32 %v889, 1.442695
    %v903 = vpow.pop %v902
    %v904 = vmul.f32 %v890, 1.442695
    %v905 = vpow.pop %v904
    %v906 = vmul.f32 %v891, 1.442695
    %v907 = vpow.pop %v906
    %v908 = vrot.slane %v893, 4
    %v909 = vadd.f32 %v893, %v908
    %v910 = vrot.slane %v909, 2
    %v911 = vadd.f32 %v909, %v910
    %v912 = vrot.slane %v911, 1
    %v913 = vadd.f32 %v911, %v912
    %v914 = vrot.slane %v895, 4
    %v915 = vadd.f32 %v895, %v914
    %v916 = vrot.slane %v915, 2
    %v917 = vadd.f32 %v915, %v916
    %v918 = vrot.slane %v917, 1
    %v919 = vadd.f32 %v917, %v918
    %v920 = vrot.slane %v897, 4
    %v921 = vadd.f32 %v897, %v920
    %v922 = vrot.slane %v921, 2
    %v923 = vadd.f32 %v921, %v922
    %v924 = vrot.slane %v923, 1
    %v925 = vadd.f32 %v923, %v924
    %v926 = vrot.slane %v899, 4
    %v927 = vadd.f32 %v899, %v926
    %v928 = vrot.slane %v927, 2
    %v929 = vadd.f32 %v927, %v928
    %v930 = vrot.slane %v929, 1
    %v931 = vadd.f32 %v929, %v930
    %v932 = vrot.slane %v901, 4
    %v933 = vadd.f32 %v901, %v932
    %v934 = vrot.slane %v933, 2
    %v935 = vadd.f32 %v933, %v934
    %v936 = vrot.slane %v935, 1
    %v937 = vadd.f32 %v935, %v936
    %v938 = vrot.slane %v903, 4
    %v939 = vadd.f32 %v903, %v938
    %v940 = vrot.slane %v939, 2
    %v941 = vadd.f32 %v939, %v940
    %v942 = vrot.slane %v941, 1
    %v943 = vadd.f32 %v941, %v942
    %v944 = vrot.slane %v905, 4
    %v945 = vadd.f32 %v905, %v944
    %v946 = vrot.slane %v945, 2
    %v947 = vadd.f32 %v945, %v946
    %v948 = vrot.slane %v947, 1
    %v949 = vadd.f32 %v947, %v948
    %v950 = vrot.slane %v907, 4
    %v951 = vadd.f32 %v907, %v950
    %v952 = vrot.slane %v951, 2
    %v953 = vadd.f32 %v951, %v952
    %v954 = vrot.slane %v953, 1
    %v955 = vadd.f32 %v953, %v954
    %v956 = vlog2.pop %v913
    %v957 = vmul.f32 %v956, 0.6931472
    %v958 = vlog2.pop %v919
    %v959 = vmul.f32 %v958, 0.6931472
    %v960 = vlog2.pop %v925
    %v961 = vmul.f32 %v960, 0.6931472
    %v962 = vlog2.pop %v931
    %v963 = vmul.f32 %v962, 0.6931472
    %v964 = vlog2.pop %v937
    %v965 = vmul.f32 %v964, 0.6931472
    %v966 = vlog2.pop %v943
    %v967 = vmul.f32 %v966, 0.6931472
    %v968 = vlog2.pop %v949
    %v969 = vmul.f32 %v968, 0.6931472
    %v970 = vlog2.pop %v955
    %v971 = vmul.f32 %v970, 0.6931472
    %v972 = vsub.f32 %v884, %v957
    %v973 = vsub.f32 %v885, %v959
    %v974 = vsub.f32 %v886, %v961
    %v975 = vsub.f32 %v887, %v963
    %v976 = vsub.f32 %v888, %v965
    %v977 = vsub.f32 %v889, %v967
    %v978 = vsub.f32 %v890, %v969
    %v979 = vsub.f32 %v891, %v971
    %980 = vst [vmem:[#allocation5] sm:$0xff] %v972
    %981 = vst [vmem:[#allocation5 + $0x8] sm:$0xff] %v973
    %982 = vst [vmem:[#allocation5 + $0x10] sm:$0xff] %v974
    %983 = vst [vmem:[#allocation5 + $0x18] sm:$0xff] %v975
    %984 = vst [vmem:[#allocation5 + $0x20] sm:$0xff] %v976
    %985 = vst [vmem:[#allocation5 + $0x28] sm:$0xff] %v977
    %986 = vst [vmem:[#allocation5 + $0x30] sm:$0xff] %v978
    %987 = vst [vmem:[#allocation5 + $0x38] sm:$0xff] %v979
    // Predicated region
    $region18: #{tpu_custom_call.1} parent=1 // pred_check
      _
    $region19: #{tpu_custom_call.1} parent=1 // pred_check_branch
      %989 = sbr.rel (0) target = $region21
    $region20: #{tpu_custom_call.1} parent=1 // pred_region
      %s991 = ssub.s32 1024, 1024
      %992 = vsyncadd [#allocation4], %s991
      %s994 = sshll.u32 [#allocation5], 4
      %s995 = int_to_ptr.vmem [resolvable:$true] %s994
      %997 = dma.vmem_to_hbm [thread:$0]  %s995, 1024, %s3, [#allocation4]
    $region21: #{tpu_custom_call.1} parent=1 // pred_fallthru
      _
    // Predicated region
    $region22: #{tpu_custom_call.1} parent=1 // pred_check
      _
    $region23: #{tpu_custom_call.1} parent=1 // pred_check_branch
      %999 = sbr.rel (0) target = $region25
    $region24: #{tpu_custom_call.1} parent=1 // pred_region
      %1000 = dma.done [#allocation4], 1024
    $region25: #{tpu_custom_call.1} parent=1 // pred_fallthru
      _
    %1001 = vsyncpa [#allocation3], 1
    %1002 = vsyncpa [#allocation4], 1

</llo_original>
